<compile_context>
chip_gen: v6e
topology: v6e:2x2x1
jax: 0.10.0
libtpu: 0.0.40
codegen_flags: <defaults>
</compile_context>

<pallas_src>
import functools

import jax
import jax.numpy as jnp
from jax.experimental import pallas as pl
from jax.experimental.pallas import tpu as pltpu


def _two_stage_quantile_kernel(taus, scale_raw, scale_std, batch, tile_b,
                               need_mask,
                               yp_raw_ref, yt_raw_ref, yp_std_ref, yt_std_ref,
                               out_ref, acc_ref):
    """One row-tile of both stages; accumulates the scaled pinball sum.

    out_ref : (1, 1) SMEM  -- final loss, written on the last grid step.
    acc_ref : (1, 1) SMEM scratch -- running sum across grid steps.
    """
    tau_sum = float(sum(taus))
    pid = pl.program_id(0)

    if need_mask:
        row = jax.lax.broadcasted_iota(jnp.int32, (tile_b, 1), 0)
        valid = (row + pid * tile_b) < batch        # (TB, 1) bool
    else:
        valid = None

    def stage_sum(yt_ref, yp_ref):
        yt = yt_ref[...].astype(jnp.float32)        # (TB, S)
        yp = yp_ref[...].astype(jnp.float32)        # (TB, Q)
        if valid is not None:
            # Ragged last tile: out-of-range rows hold unspecified data.
            yt = jnp.where(valid, yt, 0.0)
            yp = jnp.where(valid, yp, 0.0)
        seq = yt.shape[1]

        # sum_i pinball_i = tau_sum*yt - sum_i tau_i*p_i + sum_i relu(p_i-yt)
        acc = tau_sum * yt                          # (TB, S)
        wsum = jnp.zeros((yt.shape[0], 1), jnp.float32)   # (TB, 1)
        for i, tau in enumerate(taus):              # Q is tiny -> unrolled
            p = yp[:, i:i + 1]                      # (TB, 1)
            wsum = wsum + tau * p
            acc = acc + jnp.maximum(p - yt, 0.0)

        return jnp.sum(acc) - float(seq) * jnp.sum(wsum)

    step = (scale_raw * stage_sum(yt_raw_ref, yp_raw_ref)
            + scale_std * stage_sum(yt_std_ref, yp_std_ref))

    @pl.when(pid == 0)
    def _():
        acc_ref[0, 0] = jnp.float32(0.0)

    acc_ref[0, 0] = acc_ref[0, 0] + step

    @pl.when(pid == pl.num_programs(0) - 1)
    def _():
        out_ref[0, 0] = acc_ref[0, 0]


def _pick_tile(batch, seq_raw, seq_std, num_q, itemsize, row_tile):
    """Rows per grid step: big enough to amortize the per-step overhead,
    small enough that double-buffered raw+std inputs fit comfortably in VMEM."""
    if row_tile is not None:
        cap = max(int(row_tile), 8)
    else:
        budget = 16 * 1024 * 1024                   # bytes, with headroom
        per_row = 2 * itemsize * (seq_raw + seq_std + 2 * num_q)  # x2 buffers
        cap = max(8, min(1024, budget // max(per_row, 1)))
    if batch <= cap:
        return batch                                # single full-dim block
    return max(8, (cap // 8) * 8)                   # sublane-aligned tile


def two_stage_quantile_loss(y_pred_raw, y_true_raw, y_pred_std, y_true_std,
                            taus, *, row_tile=None):
    """JAX wrapper matching TwoStageQuantileLoss.forward semantics.

    Args:
      y_pred_raw: (B, Q) predicted raw returns.
      y_true_raw: (B, S_raw, 1) true raw returns.
      y_pred_std: (B, Q) predicted standardized returns.
      y_true_std: (B, S_std, 1) true standardized returns.
      taus: tuple/list of quantile levels (static).
      row_tile: optional override for rows per grid step.
    Returns:
      scalar float32 loss.
    """
    taus = tuple(float(t) for t in taus)
    num_q = len(taus)
    batch, seq_raw, _ = y_true_raw.shape
    _, seq_std, _ = y_true_std.shape
    assert y_true_std.shape[0] == batch
    assert y_pred_raw.shape == (batch, num_q)
    assert y_pred_std.shape == (batch, num_q)

    # Drop the trailing singleton dim so the last (lane) axis is the seq axis.
    yt_raw = jnp.squeeze(y_true_raw, axis=-1)       # (B, S_raw)
    yt_std = jnp.squeeze(y_true_std, axis=-1)       # (B, S_std)

    itemsize = max(jnp.dtype(a.dtype).itemsize
                   for a in (y_pred_raw, yt_raw, y_pred_std, yt_std))
    tile_b = _pick_tile(batch, seq_raw, seq_std, num_q, itemsize, row_tile)
    n_tiles = pl.cdiv(batch, tile_b)
    need_mask = (batch % tile_b) != 0

    scale_raw = 1.0 / float(num_q * batch * seq_raw)
    scale_std = 1.0 / float(num_q * batch * seq_std)

    kernel = functools.partial(_two_stage_quantile_kernel, taus,
                               scale_raw, scale_std, batch, tile_b, need_mask)

    out = pl.pallas_call(
        kernel,
        out_shape=jax.ShapeDtypeStruct((1, 1), jnp.float32),
        grid_spec=pltpu.PrefetchScalarGridSpec(
            num_scalar_prefetch=0,
            grid=(n_tiles,),
            in_specs=[
                pl.BlockSpec((tile_b, num_q), lambda i: (i, 0)),    # y_pred_raw
                pl.BlockSpec((tile_b, seq_raw), lambda i: (i, 0)),  # y_true_raw
                pl.BlockSpec((tile_b, num_q), lambda i: (i, 0)),    # y_pred_std
                pl.BlockSpec((tile_b, seq_std), lambda i: (i, 0)),  # y_true_std
            ],
            out_specs=pl.BlockSpec((1, 1), lambda i: (0, 0),
                                   memory_space=pltpu.SMEM),
            scratch_shapes=[pltpu.SMEM((1, 1), jnp.float32)],
        ),
        compiler_params=pltpu.CompilerParams(
            dimension_semantics=("arbitrary",)),
    )(y_pred_raw, yt_raw, y_pred_std, yt_std)
    return out[0, 0]


def _reference_loss(y_pred_raw, y_true_raw, y_pred_std, y_true_std, taus):
    """Pure-JAX reference mirroring the PyTorch module."""
    def agg(yt, yp):
        yt = yt.astype(jnp.float32)
        yp = yp.astype(jnp.float32)
        losses = []
        for i, tau in enumerate(taus):
            pred = yp[:, i].reshape(-1, 1)[:, None, :]          # (B, 1, 1)
            diff = yt - pred                                    # (B, S, 1)
            losses.append(jnp.mean(jnp.maximum(tau * diff, (tau - 1.0) * diff)))
        return jnp.mean(jnp.stack(losses))
    return agg(y_true_raw, y_pred_raw) + agg(y_true_std, y_pred_std)


if __name__ == "__main__":
    taus = (0.1, 0.25, 0.5, 0.75, 0.9)
    Q = len(taus)
    key = jax.random.PRNGKey(0)

    def make(key, B, S):
        k1, k2, k3, k4, key = jax.random.split(key, 5)
        return (jax.random.normal(k1, (B, Q), dtype=jnp.float32),
                jax.random.normal(k2, (B, S, 1), dtype=jnp.float32),
                jax.random.normal(k3, (B, Q), dtype=jnp.float32),
                jax.random.normal(k4, (B, S, 1), dtype=jnp.float32),
                key)

    # --- Test 1: canonical small shapes (single full-dim tile) ---
    yp_r, yt_r, yp_s, yt_s, key = make(key, 8, 16)
    loss = jax.block_until_ready(
        two_stage_quantile_loss(yp_r, yt_r, yp_s, yt_s, taus))
    ref = _reference_loss(yp_r, yt_r, yp_s, yt_s, taus)
    assert jnp.allclose(loss, ref, atol=1e-5, rtol=1e-4), (loss, ref)

    # --- Test 2: multi-step grid + ragged last tile (in-kernel masking) ---
    yp_r, yt_r, yp_s, yt_s, key = make(key, 20, 16)
    loss2 = jax.block_until_ready(
        two_stage_quantile_loss(yp_r, yt_r, yp_s, yt_s, taus, row_tile=8))
    ref2 = _reference_loss(yp_r, yt_r, yp_s, yt_s, taus)
    assert jnp.allclose(loss2, ref2, atol=1e-5, rtol=1e-4), (loss2, ref2)

    # --- Test 3: same data, single tile whose row count is not a multiple
    #             of 8 (block == full array dims, no masking) ---
    loss3 = jax.block_until_ready(
        two_stage_quantile_loss(yp_r, yt_r, yp_s, yt_s, taus))
    assert jnp.allclose(loss3, ref2, atol=1e-5, rtol=1e-4), (loss3, ref2)

    # --- Test 4: multi-tile, evenly dividing (no masking, 4 grid steps) ---
    yp_r, yt_r, yp_s, yt_s, key = make(key, 64, 32)
    loss4 = jax.block_until_ready(
        two_stage_quantile_loss(yp_r, yt_r, yp_s, yt_s, taus, row_tile=16))
    ref4 = _reference_loss(yp_r, yt_r, yp_s, yt_s, taus)
    assert jnp.allclose(loss4, ref4, atol=1e-5, rtol=1e-4), (loss4, ref4)

    print("KERNEL_OK")
</pallas_src>

<mosaic_0001>
module attributes {stable_mosaic.version = 11 : i64} {
  func.func @_two_stage_quantile_kernel(%arg0: i32, %arg1: memref<8x5xf32, #tpu.memory_space<vmem>>, %arg2: memref<8x16xf32, #tpu.memory_space<vmem>>, %arg3: memref<8x5xf32, #tpu.memory_space<vmem>>, %arg4: memref<8x16xf32, #tpu.memory_space<vmem>>, %arg5: memref<1x1xf32, #tpu.memory_space<smem>>, %arg6: memref<1x1xf32, #tpu.memory_space<smem>>) attributes {dimension_semantics = [#tpu.dimension_semantics<arbitrary>], iteration_bounds = array<i64: 1>, scalar_prefetch = 0 : i64, scratch_operands = 1 : i64, tpu.core_type = #tpu.core_type<tc>, window_params = [{transform_indices = @transform_0, window_bounds = array<i64: 8, 5>}, {transform_indices = @transform_1, window_bounds = array<i64: 8, 16>}, {transform_indices = @transform_2, window_bounds = array<i64: 8, 5>}, {transform_indices = @transform_3, window_bounds = array<i64: 8, 16>}, {transform_indices = @transform_4, window_bounds = array<i64: 1, 1>}]} {
    %c0 = arith.constant 0 : index
    %c0_0 = arith.constant 0 : index
    %0 = vector.load %arg2[%c0, %c0_0] : memref<8x16xf32, #tpu.memory_space<vmem>>, vector<8x16xf32>
    %c0_1 = arith.constant 0 : index
    %c0_2 = arith.constant 0 : index
    %1 = vector.load %arg1[%c0_1, %c0_2] : memref<8x5xf32, #tpu.memory_space<vmem>>, vector<8x5xf32>
    %cst = arith.constant 2.500000e+00 : f32
    %2 = vector.broadcast %cst : f32 to vector<8x16xf32>
    %3 = arith.mulf %2, %0 : vector<8x16xf32>
    %cst_3 = arith.constant 0.000000e+00 : f32
    %4 = vector.broadcast %cst_3 : f32 to vector<8x1xf32>
    %5 = vector.extract_strided_slice %1 {offsets = [0, 0], sizes = [8, 1], strides = [1, 1]} : vector<8x5xf32> to vector<8x1xf32>
    %cst_4 = arith.constant 1.000000e-01 : f32
    %6 = vector.broadcast %cst_4 : f32 to vector<8x1xf32>
    %7 = arith.mulf %6, %5 : vector<8x1xf32>
    %8 = arith.addf %4, %7 : vector<8x1xf32>
    %9 = vector.broadcast %5 : vector<8x1xf32> to vector<8x16xf32>
    %10 = arith.subf %9, %0 : vector<8x16xf32>
    %cst_5 = arith.constant 0.000000e+00 : f32
    %11 = vector.broadcast %cst_5 : f32 to vector<8x16xf32>
    %12 = arith.maximumf %10, %11 : vector<8x16xf32>
    %13 = arith.addf %3, %12 : vector<8x16xf32>
    %14 = vector.extract_strided_slice %1 {offsets = [0, 1], sizes = [8, 1], strides = [1, 1]} : vector<8x5xf32> to vector<8x1xf32>
    %cst_6 = arith.constant 2.500000e-01 : f32
    %15 = vector.broadcast %cst_6 : f32 to vector<8x1xf32>
    %16 = arith.mulf %15, %14 : vector<8x1xf32>
    %17 = arith.addf %8, %16 : vector<8x1xf32>
    %18 = vector.broadcast %14 : vector<8x1xf32> to vector<8x16xf32>
    %19 = arith.subf %18, %0 : vector<8x16xf32>
    %cst_7 = arith.constant 0.000000e+00 : f32
    %20 = vector.broadcast %cst_7 : f32 to vector<8x16xf32>
    %21 = arith.maximumf %19, %20 : vector<8x16xf32>
    %22 = arith.addf %13, %21 : vector<8x16xf32>
    %23 = vector.extract_strided_slice %1 {offsets = [0, 2], sizes = [8, 1], strides = [1, 1]} : vector<8x5xf32> to vector<8x1xf32>
    %cst_8 = arith.constant 5.000000e-01 : f32
    %24 = vector.broadcast %cst_8 : f32 to vector<8x1xf32>
    %25 = arith.mulf %24, %23 : vector<8x1xf32>
    %26 = arith.addf %17, %25 : vector<8x1xf32>
    %27 = vector.broadcast %23 : vector<8x1xf32> to vector<8x16xf32>
    %28 = arith.subf %27, %0 : vector<8x16xf32>
    %cst_9 = arith.constant 0.000000e+00 : f32
    %29 = vector.broadcast %cst_9 : f32 to vector<8x16xf32>
    %30 = arith.maximumf %28, %29 : vector<8x16xf32>
    %31 = arith.addf %22, %30 : vector<8x16xf32>
    %32 = vector.extract_strided_slice %1 {offsets = [0, 3], sizes = [8, 1], strides = [1, 1]} : vector<8x5xf32> to vector<8x1xf32>
    %cst_10 = arith.constant 7.500000e-01 : f32
    %33 = vector.broadcast %cst_10 : f32 to vector<8x1xf32>
    %34 = arith.mulf %33, %32 : vector<8x1xf32>
    %35 = arith.addf %26, %34 : vector<8x1xf32>
    %36 = vector.broadcast %32 : vector<8x1xf32> to vector<8x16xf32>
    %37 = arith.subf %36, %0 : vector<8x16xf32>
    %cst_11 = arith.constant 0.000000e+00 : f32
    %38 = vector.broadcast %cst_11 : f32 to vector<8x16xf32>
    %39 = arith.maximumf %37, %38 : vector<8x16xf32>
    %40 = arith.addf %31, %39 : vector<8x16xf32>
    %41 = vector.extract_strided_slice %1 {offsets = [0, 4], sizes = [8, 1], strides = [1, 1]} : vector<8x5xf32> to vector<8x1xf32>
    %cst_12 = arith.constant 0.899999976 : f32
    %42 = vector.broadcast %cst_12 : f32 to vector<8x1xf32>
    %43 = arith.mulf %42, %41 : vector<8x1xf32>
    %44 = arith.addf %35, %43 : vector<8x1xf32>
    %45 = vector.broadcast %41 : vector<8x1xf32> to vector<8x16xf32>
    %46 = arith.subf %45, %0 : vector<8x16xf32>
    %cst_13 = arith.constant 0.000000e+00 : f32
    %47 = vector.broadcast %cst_13 : f32 to vector<8x16xf32>
    %48 = arith.maximumf %46, %47 : vector<8x16xf32>
    %49 = arith.addf %40, %48 : vector<8x16xf32>
    %50 = vector.shape_cast %49 : vector<8x16xf32> to vector<1x8x16xf32>
    %cst_14 = arith.constant dense<0.000000e+00> : vector<1xf32>
    %51 = vector.multi_reduction <add>, %50, %cst_14 [1, 2] : vector<1x8x16xf32> to vector<1xf32>
    %52 = vector.shape_cast %51 : vector<1xf32> to vector<1x1x1xf32>
    %53 = vector.extract %52[0, 0, 0] : f32 from vector<1x1x1xf32>
    %54 = vector.shape_cast %44 : vector<8x1xf32> to vector<1x8x1xf32>
    %cst_15 = arith.constant dense<0.000000e+00> : vector<1xf32>
    %55 = vector.multi_reduction <add>, %54, %cst_15 [1, 2] : vector<1x8x1xf32> to vector<1xf32>
    %56 = vector.shape_cast %55 : vector<1xf32> to vector<1x1x1xf32>
    %57 = vector.extract %56[0, 0, 0] : f32 from vector<1x1x1xf32>
    %cst_16 = arith.constant 1.600000e+01 : f32
    %58 = arith.mulf %cst_16, %57 : f32
    %59 = arith.subf %53, %58 : f32
    %cst_17 = arith.constant 1.562500e-03 : f32
    %60 = arith.mulf %cst_17, %59 : f32
    %c0_18 = arith.constant 0 : index
    %c0_19 = arith.constant 0 : index
    %61 = vector.load %arg4[%c0_18, %c0_19] : memref<8x16xf32, #tpu.memory_space<vmem>>, vector<8x16xf32>
    %c0_20 = arith.constant 0 : index
    %c0_21 = arith.constant 0 : index
    %62 = vector.load %arg3[%c0_20, %c0_21] : memref<8x5xf32, #tpu.memory_space<vmem>>, vector<8x5xf32>
    %cst_22 = arith.constant 2.500000e+00 : f32
    %63 = vector.broadcast %cst_22 : f32 to vector<8x16xf32>
    %64 = arith.mulf %63, %61 : vector<8x16xf32>
    %cst_23 = arith.constant 0.000000e+00 : f32
    %65 = vector.broadcast %cst_23 : f32 to vector<8x1xf32>
    %66 = vector.extract_strided_slice %62 {offsets = [0, 0], sizes = [8, 1], strides = [1, 1]} : vector<8x5xf32> to vector<8x1xf32>
    %cst_24 = arith.constant 1.000000e-01 : f32
    %67 = vector.broadcast %cst_24 : f32 to vector<8x1xf32>
    %68 = arith.mulf %67, %66 : vector<8x1xf32>
    %69 = arith.addf %65, %68 : vector<8x1xf32>
    %70 = vector.broadcast %66 : vector<8x1xf32> to vector<8x16xf32>
    %71 = arith.subf %70, %61 : vector<8x16xf32>
    %cst_25 = arith.constant 0.000000e+00 : f32
    %72 = vector.broadcast %cst_25 : f32 to vector<8x16xf32>
    %73 = arith.maximumf %71, %72 : vector<8x16xf32>
    %74 = arith.addf %64, %73 : vector<8x16xf32>
    %75 = vector.extract_strided_slice %62 {offsets = [0, 1], sizes = [8, 1], strides = [1, 1]} : vector<8x5xf32> to vector<8x1xf32>
    %cst_26 = arith.constant 2.500000e-01 : f32
    %76 = vector.broadcast %cst_26 : f32 to vector<8x1xf32>
    %77 = arith.mulf %76, %75 : vector<8x1xf32>
    %78 = arith.addf %69, %77 : vector<8x1xf32>
    %79 = vector.broadcast %75 : vector<8x1xf32> to vector<8x16xf32>
    %80 = arith.subf %79, %61 : vector<8x16xf32>
    %cst_27 = arith.constant 0.000000e+00 : f32
    %81 = vector.broadcast %cst_27 : f32 to vector<8x16xf32>
    %82 = arith.maximumf %80, %81 : vector<8x16xf32>
    %83 = arith.addf %74, %82 : vector<8x16xf32>
    %84 = vector.extract_strided_slice %62 {offsets = [0, 2], sizes = [8, 1], strides = [1, 1]} : vector<8x5xf32> to vector<8x1xf32>
    %cst_28 = arith.constant 5.000000e-01 : f32
    %85 = vector.broadcast %cst_28 : f32 to vector<8x1xf32>
    %86 = arith.mulf %85, %84 : vector<8x1xf32>
    %87 = arith.addf %78, %86 : vector<8x1xf32>
    %88 = vector.broadcast %84 : vector<8x1xf32> to vector<8x16xf32>
    %89 = arith.subf %88, %61 : vector<8x16xf32>
    %cst_29 = arith.constant 0.000000e+00 : f32
    %90 = vector.broadcast %cst_29 : f32 to vector<8x16xf32>
    %91 = arith.maximumf %89, %90 : vector<8x16xf32>
    %92 = arith.addf %83, %91 : vector<8x16xf32>
    %93 = vector.extract_strided_slice %62 {offsets = [0, 3], sizes = [8, 1], strides = [1, 1]} : vector<8x5xf32> to vector<8x1xf32>
    %cst_30 = arith.constant 7.500000e-01 : f32
    %94 = vector.broadcast %cst_30 : f32 to vector<8x1xf32>
    %95 = arith.mulf %94, %93 : vector<8x1xf32>
    %96 = arith.addf %87, %95 : vector<8x1xf32>
    %97 = vector.broadcast %93 : vector<8x1xf32> to vector<8x16xf32>
    %98 = arith.subf %97, %61 : vector<8x16xf32>
    %cst_31 = arith.constant 0.000000e+00 : f32
    %99 = vector.broadcast %cst_31 : f32 to vector<8x16xf32>
    %100 = arith.maximumf %98, %99 : vector<8x16xf32>
    %101 = arith.addf %92, %100 : vector<8x16xf32>
    %102 = vector.extract_strided_slice %62 {offsets = [0, 4], sizes = [8, 1], strides = [1, 1]} : vector<8x5xf32> to vector<8x1xf32>
    %cst_32 = arith.constant 0.899999976 : f32
    %103 = vector.broadcast %cst_32 : f32 to vector<8x1xf32>
    %104 = arith.mulf %103, %102 : vector<8x1xf32>
    %105 = arith.addf %96, %104 : vector<8x1xf32>
    %106 = vector.broadcast %102 : vector<8x1xf32> to vector<8x16xf32>
    %107 = arith.subf %106, %61 : vector<8x16xf32>
    %cst_33 = arith.constant 0.000000e+00 : f32
    %108 = vector.broadcast %cst_33 : f32 to vector<8x16xf32>
    %109 = arith.maximumf %107, %108 : vector<8x16xf32>
    %110 = arith.addf %101, %109 : vector<8x16xf32>
    %111 = vector.shape_cast %110 : vector<8x16xf32> to vector<1x8x16xf32>
    %cst_34 = arith.constant dense<0.000000e+00> : vector<1xf32>
    %112 = vector.multi_reduction <add>, %111, %cst_34 [1, 2] : vector<1x8x16xf32> to vector<1xf32>
    %113 = vector.shape_cast %112 : vector<1xf32> to vector<1x1x1xf32>
    %114 = vector.extract %113[0, 0, 0] : f32 from vector<1x1x1xf32>
    %115 = vector.shape_cast %105 : vector<8x1xf32> to vector<1x8x1xf32>
    %cst_35 = arith.constant dense<0.000000e+00> : vector<1xf32>
    %116 = vector.multi_reduction <add>, %115, %cst_35 [1, 2] : vector<1x8x1xf32> to vector<1xf32>
    %117 = vector.shape_cast %116 : vector<1xf32> to vector<1x1x1xf32>
    %118 = vector.extract %117[0, 0, 0] : f32 from vector<1x1x1xf32>
    %cst_36 = arith.constant 1.600000e+01 : f32
    %119 = arith.mulf %cst_36, %118 : f32
    %120 = arith.subf %114, %119 : f32
    %cst_37 = arith.constant 1.562500e-03 : f32
    %121 = arith.mulf %cst_37, %120 : f32
    %122 = arith.addf %60, %121 : f32
    %c0_i32 = arith.constant 0 : i32
    %123 = arith.cmpi eq, %arg0, %c0_i32 : i32
    %124 = arith.extui %123 : i1 to i32
    %c0_i32_38 = arith.constant 0 : i32
    %125 = arith.cmpi ne, %124, %c0_i32_38 : i32
    scf.if %125 {
      %cst_45 = arith.constant 0.000000e+00 : f32
      %c0_46 = arith.constant 0 : index
      %c0_47 = arith.constant 0 : index
      %132 = memref.load %arg6[%c0_46, %c0_47] : memref<1x1xf32, #tpu.memory_space<smem>>
      memref.store %cst_45, %arg6[%c0_46, %c0_47] : memref<1x1xf32, #tpu.memory_space<smem>>
    } else {
    }
    %c0_39 = arith.constant 0 : index
    %c0_40 = arith.constant 0 : index
    %126 = memref.load %arg6[%c0_39, %c0_40] : memref<1x1xf32, #tpu.memory_space<smem>>
    %127 = arith.addf %126, %122 : f32
    %c0_41 = arith.constant 0 : index
    %c0_42 = arith.constant 0 : index
    %128 = memref.load %arg6[%c0_41, %c0_42] : memref<1x1xf32, #tpu.memory_space<smem>>
    memref.store %127, %arg6[%c0_41, %c0_42] : memref<1x1xf32, #tpu.memory_space<smem>>
    %c0_i32_43 = arith.constant 0 : i32
    %129 = arith.cmpi eq, %arg0, %c0_i32_43 : i32
    %130 = arith.extui %129 : i1 to i32
    %c0_i32_44 = arith.constant 0 : i32
    %131 = arith.cmpi ne, %130, %c0_i32_44 : i32
    scf.if %131 {
      %c0_45 = arith.constant 0 : index
      %c0_46 = arith.constant 0 : index
      %132 = memref.load %arg6[%c0_45, %c0_46] : memref<1x1xf32, #tpu.memory_space<smem>>
      %c0_47 = arith.constant 0 : index
      %c0_48 = arith.constant 0 : index
      %133 = memref.load %arg5[%c0_47, %c0_48] : memref<1x1xf32, #tpu.memory_space<smem>>
      memref.store %132, %arg5[%c0_47, %c0_48] : memref<1x1xf32, #tpu.memory_space<smem>>
    } else {
    }
    return
  }
  func.func @transform_0(%arg0: i32) -> (i32, i32) {
    %c0_i32 = arith.constant 0 : i32
    %c0_i32_0 = arith.constant 0 : i32
    return %arg0, %c0_i32 : i32, i32
  }
  func.func @transform_1(%arg0: i32) -> (i32, i32) {
    %c0_i32 = arith.constant 0 : i32
    %c0_i32_0 = arith.constant 0 : i32
    return %arg0, %c0_i32 : i32, i32
  }
  func.func @transform_2(%arg0: i32) -> (i32, i32) {
    %c0_i32 = arith.constant 0 : i32
    %c0_i32_0 = arith.constant 0 : i32
    return %arg0, %c0_i32 : i32, i32
  }
  func.func @transform_3(%arg0: i32) -> (i32, i32) {
    %c0_i32 = arith.constant 0 : i32
    %c0_i32_0 = arith.constant 0 : i32
    return %arg0, %c0_i32 : i32, i32
  }
  func.func @transform_4(%arg0: i32) -> (i32, i32) {
    %c0_i32 = arith.constant 0 : i32
    %c0_i32_0 = arith.constant 0 : i32
    %c0_i32_1 = arith.constant 0 : i32
    return %c0_i32, %c0_i32_0 : i32, i32
  }
}

</mosaic_0001>

<llo_original>
// kernel: tpu_custom_call.1
$region0: #{tpu_custom_call.1}
  #allocation0 [shape = 'u32[]', space=smem, size = 0x4, offset = 0x4, fixed_abs, tag = 'smem constant byte address 0x4 - core index']
  #allocation1 [shape = 'u32[144,128]{1,0:T(1,128)}', space=vmem, size = 0x12000, scoped, tag = 'internal scratch']
  #allocation2 [shape = 'f32[1,1]{1,0:T(1,128)}', space=smem, size = 0x200, scoped, tag = 'scratch operand']
  %s0 = inlined_call_operand.hbm [shape: f32[8,5], index: 0, kind: input, shape index: {}]
  %s1 = inlined_call_operand.hbm [shape: f32[8,16], index: 1, kind: input, shape index: {}]
  %s2 = inlined_call_operand.hbm [shape: f32[8,5], index: 2, kind: input, shape index: {}]
  %s3 = inlined_call_operand.hbm [shape: f32[8,16], index: 3, kind: input, shape index: {}]
  %s4 = inlined_call_operand.hbm [shape: f32[1,1], index: 4, kind: output, shape index: {}]
  %s5 = sld [smem:[#allocation0]]
  $region50: #{tpu_custom_call.1} parent=0
    _
  %s7 = ssub.s32 1, %s5
  %s8 = scalar_select 0, %s7, %s5
  $region1: #{tpu_custom_call.1} parent=0
    #allocation3 [shape = 'u8[4096]{0}', space=vmem, size = 0x1000, scoped, tag = 'input window, operand 0, single buffered']
    #allocation4 [shape = 's32[1]{0}', space=sflag, size = 0x4, scoped, tag = 'scoped memory for tpu_custom_call.1']
    #allocation5 [shape = 's32[1]{0}', space=sflag, size = 0x4, scoped, tag = 'scoped memory for tpu_custom_call.1']
    #allocation6 [shape = 'u8[4096]{0}', space=vmem, size = 0x1000, scoped, tag = 'input window, operand 1, single buffered']
    #allocation7 [shape = 's32[1]{0}', space=sflag, size = 0x4, scoped, tag = 'scoped memory for tpu_custom_call.1']
    #allocation8 [shape = 'u8[4096]{0}', space=vmem, size = 0x1000, scoped, tag = 'input window, operand 2, single buffered']
    #allocation9 [shape = 'u8[4096]{0}', space=vmem, size = 0x1000, scoped, tag = 'input window, operand 3, single buffered']
    #allocation10 [shape = 's32[1]{0}', space=sflag, size = 0x4, scoped, tag = 'scoped memory for tpu_custom_call.1']
    #allocation11 [shape = 'u8[512]{0}', space=smem, size = 0x200, scoped, tag = 'output window, operand 0, single buffered']
    %9 = vsyncpa [#allocation4], 0
    %10 = vsyncpa [#allocation7], 0
    %11 = vsyncpa [#allocation10], 0
    %12 = vsyncpa [#allocation5], 0
    // Predicated region
    $region2: #{tpu_custom_call.1} parent=1 // pred_check
      _
    $region3: #{tpu_custom_call.1} parent=1 // pred_check_branch
      %14 = sbr.rel (0) target = $region5
    $region4: #{tpu_custom_call.1} parent=1 // pred_region
      %s16 = ssub.s32 128, 128
      %17 = vsyncadd [#allocation4], %s16
      %s19 = sshll.u32 [#allocation3], 4
      %s20 = int_to_ptr.vmem [resolvable:$true] %s19
      %22 = dma.hbm_to_vmem [thread:$0]  %s0, 128, %s20, [#allocation4]
    $region5: #{tpu_custom_call.1} parent=1 // pred_fallthru
      _
    // Predicated region
    $region6: #{tpu_custom_call.1} parent=1 // pred_check
      _
    $region7: #{tpu_custom_call.1} parent=1 // pred_check_branch
      %24 = sbr.rel (0) target = $region9
    $region8: #{tpu_custom_call.1} parent=1 // pred_region
      %s26 = ssub.s32 128, 128
      %27 = vsyncadd [#allocation7], %s26
      %s29 = sshll.u32 [#allocation6], 4
      %s30 = int_to_ptr.vmem [resolvable:$true] %s29
      %32 = dma.hbm_to_vmem [thread:$0]  %s1, 128, %s30, [#allocation7]
    $region9: #{tpu_custom_call.1} parent=1 // pred_fallthru
      _
    // Predicated region
    $region10: #{tpu_custom_call.1} parent=1 // pred_check
      _
    $region11: #{tpu_custom_call.1} parent=1 // pred_check_branch
      %34 = sbr.rel (0) target = $region13
    $region12: #{tpu_custom_call.1} parent=1 // pred_region
      %s36 = ssub.s32 128, 128
      %37 = vsyncadd [#allocation7], %s36
      %s39 = sshll.u32 [#allocation8], 4
      %s40 = int_to_ptr.vmem [resolvable:$true] %s39
      %42 = dma.hbm_to_vmem [thread:$0]  %s2, 128, %s40, [#allocation7]
    $region13: #{tpu_custom_call.1} parent=1 // pred_fallthru
      _
    // Predicated region
    $region14: #{tpu_custom_call.1} parent=1 // pred_check
      _
    $region15: #{tpu_custom_call.1} parent=1 // pred_check_branch
      %44 = sbr.rel (0) target = $region17
    $region16: #{tpu_custom_call.1} parent=1 // pred_region
      %s46 = ssub.s32 128, 128
      %47 = vsyncadd [#allocation10], %s46
      %s49 = sshll.u32 [#allocation9], 4
      %s50 = int_to_ptr.vmem [resolvable:$true] %s49
      %52 = dma.hbm_to_vmem [thread:$0]  %s3, 128, %s50, [#allocation10]
    $region17: #{tpu_custom_call.1} parent=1 // pred_fallthru
      _
    // Predicated region
    $region18: #{tpu_custom_call.1} parent=1 // pred_check
      _
    $region19: #{tpu_custom_call.1} parent=1 // pred_check_branch
      %54 = sbr.rel (0) target = $region21
    $region20: #{tpu_custom_call.1} parent=1 // pred_region
      %55 = dma.done [#allocation4], 128
    $region21: #{tpu_custom_call.1} parent=1 // pred_fallthru
      _
    // Predicated region
    $region22: #{tpu_custom_call.1} parent=1 // pred_check
      _
    $region23: #{tpu_custom_call.1} parent=1 // pred_check_branch
      %57 = sbr.rel (0) target = $region25
    $region24: #{tpu_custom_call.1} parent=1 // pred_region
      %58 = dma.done [#allocation7], 128
    $region25: #{tpu_custom_call.1} parent=1 // pred_fallthru
      _
    // Predicated region
    $region26: #{tpu_custom_call.1} parent=1 // pred_check
      _
    $region27: #{tpu_custom_call.1} parent=1 // pred_check_branch
      %60 = sbr.rel (0) target = $region29
    $region28: #{tpu_custom_call.1} parent=1 // pred_region
      %61 = dma.done [#allocation7], 128
    $region29: #{tpu_custom_call.1} parent=1 // pred_fallthru
      _
    // Predicated region
    $region30: #{tpu_custom_call.1} parent=1 // pred_check
      _
    $region31: #{tpu_custom_call.1} parent=1 // pred_check_branch
      %63 = sbr.rel (0) target = $region33
    $region32: #{tpu_custom_call.1} parent=1 // pred_region
      %64 = dma.done [#allocation10], 128
    $region33: #{tpu_custom_call.1} parent=1 // pred_fallthru
      _
    %v65 = vld [vmem:[#allocation6] sm:$0xff]
    %v66 = vld [vmem:[#allocation3] sm:$0xff]
    %v67 = vmul.f32 %v65, 2.5
    %v68 = vmul.f32 %v66, 0.1
    %v69 = vadd.f32 %v68, 0.0
    %71 = vset.pattern.permute.xlu0 0
    %72 = vperm.xlu0 %71, %v66
    %v73 = vpop.permute.xlu0 %72
    %v75 = vsub.f32 %v73, %v65
    %v76 = vmax.f32 %v75, 0.0
    %v77 = vadd.f32 %v67, %v76
    %v78 = vmul.f32 %v66, 0.25
    %80 = vrot.lane.b32.xlu0 %v78, 127
    %v81 = vpop.permute.xlu0 %80
    %v83 = vadd.f32 %v69, %v81
    %84 = vset.pattern.permute.xlu0 1
    %85 = vperm.xlu0 %84, %v66
    %v86 = vpop.permute.xlu0 %85
    %v88 = vsub.f32 %v86, %v65
    %v89 = vmax.f32 %v88, 0.0
    %v90 = vadd.f32 %v77, %v89
    %v91 = vmul.f32 %v66, 0.5
    %93 = vrot.lane.b32.xlu0 %v91, 126
    %v94 = vpop.permute.xlu0 %93
    %v96 = vadd.f32 %v83, %v94
    %97 = vset.pattern.permute.xlu0 2
    %98 = vperm.xlu0 %97, %v66
    %v99 = vpop.permute.xlu0 %98
    %v101 = vsub.f32 %v99, %v65
    %v102 = vmax.f32 %v101, 0.0
    %v103 = vadd.f32 %v90, %v102
    %v104 = vmul.f32 %v66, 0.75
    %106 = vrot.lane.b32.xlu0 %v104, 125
    %v107 = vpop.permute.xlu0 %106
    %v109 = vadd.f32 %v96, %v107
    %110 = vset.pattern.permute.xlu0 3
    %111 = vperm.xlu0 %110, %v66
    %v112 = vpop.permute.xlu0 %111
    %v114 = vsub.f32 %v112, %v65
    %v115 = vmax.f32 %v114, 0.0
    %v116 = vadd.f32 %v103, %v115
    %v117 = vmul.f32 %v66, 0.9
    %119 = vrot.lane.b32.xlu0 %v117, 124
    %v120 = vpop.permute.xlu0 %119
    %v122 = vadd.f32 %v109, %v120
    %123 = vset.pattern.permute.xlu0 4
    %124 = vperm.xlu0 %123, %v66
    %v125 = vpop.permute.xlu0 %124
    %v127 = vsub.f32 %v125, %v65
    %v128 = vmax.f32 %v127, 0.0
    %v129 = vadd.f32 %v116, %v128
    %vm130 = vcmask 130048
    %v131 = vsel %vm130, %v129, 0.0
    %132 = vadd.xlane.f32.xlu0 %v131
    %v133 = vpop.xlane.xlu0 %132
    %v134 = vrot.slane %v133, 4
    %v135 = vadd.f32 %v133, %v134
    %v136 = vrot.slane %v135, 2
    %v137 = vadd.f32 %v135, %v136
    %v138 = vrot.slane %v137, 1
    %v139 = vadd.f32 %v137, %v138
    %s140 = vtos %v139
    %vm141 = vcmask 7168
    %v142 = vsel %vm141, %v122, 0.0
    %143 = vadd.xlane.f32.xlu0 %v142
    %v144 = vpop.xlane.xlu0 %143
    %v145 = vrot.slane %v144, 4
    %v146 = vadd.f32 %v144, %v145
    %v147 = vrot.slane %v146, 2
    %v148 = vadd.f32 %v146, %v147
    %v149 = vrot.slane %v148, 1
    %v150 = vadd.f32 %v148, %v149
    %s151 = vtos %v150
    %s152 = smul.f32 %s151, 16.0
    %s153 = ssub.f32 %s140, %s152
    %s154 = smul.f32 %s153, 0.0015625
    %v155 = vld [vmem:[#allocation9] sm:$0xff]
    %v156 = vld [vmem:[#allocation8] sm:$0xff]
    %v157 = vmul.f32 %v155, 2.5
    %v158 = vmul.f32 %v156, 0.1
    %v159 = vadd.f32 %v158, 0.0
    %161 = vset.pattern.permute.xlu0 0
    %162 = vperm.xlu0 %161, %v156
    %v163 = vpop.permute.xlu0 %162
    %v165 = vsub.f32 %v163, %v155
    %v166 = vmax.f32 %v165, 0.0
    %v167 = vadd.f32 %v157, %v166
    %v168 = vmul.f32 %v156, 0.25
    %170 = vrot.lane.b32.xlu0 %v168, 127
    %v171 = vpop.permute.xlu0 %170
    %v173 = vadd.f32 %v159, %v171
    %174 = vset.pattern.permute.xlu0 1
    %175 = vperm.xlu0 %174, %v156
    %v176 = vpop.permute.xlu0 %175
    %v178 = vsub.f32 %v176, %v155
    %v179 = vmax.f32 %v178, 0.0
    %v180 = vadd.f32 %v167, %v179
    %v181 = vmul.f32 %v156, 0.5
    %183 = vrot.lane.b32.xlu0 %v181, 126
    %v184 = vpop.permute.xlu0 %183
    %v186 = vadd.f32 %v173, %v184
    %187 = vset.pattern.permute.xlu0 2
    %188 = vperm.xlu0 %187, %v156
    %v189 = vpop.permute.xlu0 %188
    %v191 = vsub.f32 %v189, %v155
    %v192 = vmax.f32 %v191, 0.0
    %v193 = vadd.f32 %v180, %v192
    %v194 = vmul.f32 %v156, 0.75
    %196 = vrot.lane.b32.xlu0 %v194, 125
    %v197 = vpop.permute.xlu0 %196
    %v199 = vadd.f32 %v186, %v197
    %200 = vset.pattern.permute.xlu0 3
    %201 = vperm.xlu0 %200, %v156
    %v202 = vpop.permute.xlu0 %201
    %v204 = vsub.f32 %v202, %v155
    %v205 = vmax.f32 %v204, 0.0
    %v206 = vadd.f32 %v193, %v205
    %v207 = vmul.f32 %v156, 0.9
    %209 = vrot.lane.b32.xlu0 %v207, 124
    %v210 = vpop.permute.xlu0 %209
    %v212 = vadd.f32 %v199, %v210
    %213 = vset.pattern.permute.xlu0 4
    %214 = vperm.xlu0 %213, %v156
    %v215 = vpop.permute.xlu0 %214
    %v217 = vsub.f32 %v215, %v155
    %v218 = vmax.f32 %v217, 0.0
    %v219 = vadd.f32 %v206, %v218
    %v220 = vsel %vm130, %v219, 0.0
    %221 = vadd.xlane.f32.xlu0 %v220
    %v222 = vpop.xlane.xlu0 %221
    %v223 = vrot.slane %v222, 4
    %v224 = vadd.f32 %v222, %v223
    %v225 = vrot.slane %v224, 2
    %v226 = vadd.f32 %v224, %v225
    %v227 = vrot.slane %v226, 1
    %v228 = vadd.f32 %v226, %v227
    %s229 = vtos %v228
    %v230 = vsel %vm141, %v212, 0.0
    %231 = vadd.xlane.f32.xlu0 %v230
    %v232 = vpop.xlane.xlu0 %231
    %v233 = vrot.slane %v232, 4
    %v234 = vadd.f32 %v232, %v233
    %v235 = vrot.slane %v234, 2
    %v236 = vadd.f32 %v234, %v235
    %v237 = vrot.slane %v236, 1
    %v238 = vadd.f32 %v236, %v237
    %s239 = vtos %v238
    %s240 = smul.f32 %s239, 16.0
    %s241 = ssub.f32 %s229, %s240
    %s242 = smul.f32 %s241, 0.0015625
    %s243 = sadd.f32 %s154, %s242
    %p244 = scmp.eq.s32.totalorder 0, 0
    // Predicated region
    $region34: #{tpu_custom_call.1} parent=1 // pred_check
      %p245 = pneg %p244
    $region35: #{tpu_custom_call.1} parent=1 // pred_check_branch
      %247 = sbr.rel (%p245) target = $region37
    $region36: #{tpu_custom_call.1} parent=1 // pred_region
      %s248 = scalar_lea.smem [#allocation2], 0
      %249 = sst [smem:[%s248]] 0.0
    $region37: #{tpu_custom_call.1} parent=1 // pred_fallthru
      _
    %s250 = sld [smem:[#allocation2]]
    %s251 = sadd.f32 %s250, %s243
    %s252 = scalar_lea.smem [#allocation2], 0
    %253 = sst [smem:[%s252]] %s251
    // Predicated region
    $region38: #{tpu_custom_call.1} parent=1 // pred_check
      %p254 = pneg %p244
    $region39: #{tpu_custom_call.1} parent=1 // pred_check_branch
      %256 = sbr.rel (%p254) target = $region41
    $region40: #{tpu_custom_call.1} parent=1 // pred_region
      %s257 = sld [smem:[#allocation2]]
      %s258 = scalar_lea.smem [#allocation11], 0
      %259 = sst [smem:[%s258]] %s257
    $region41: #{tpu_custom_call.1} parent=1 // pred_fallthru
      _
    // Predicated region
    $region42: #{tpu_custom_call.1} parent=1 // pred_check
      _
    $region43: #{tpu_custom_call.1} parent=1 // pred_check_branch
      %261 = sbr.rel (0) target = $region45
    $region44: #{tpu_custom_call.1} parent=1 // pred_region
      %s263 = ssub.s32 16, 16
      %264 = vsyncadd [#allocation5], %s263
      %267 = dma.smem_to_hbm [#allocation11], 16, %s4, [#allocation5]
    $region45: #{tpu_custom_call.1} parent=1 // pred_fallthru
      _
    // Predicated region
    $region46: #{tpu_custom_call.1} parent=1 // pred_check
      _
    $region47: #{tpu_custom_call.1} parent=1 // pred_check_branch
      %269 = sbr.rel (0) target = $region49
    $region48: #{tpu_custom_call.1} parent=1 // pred_region
      %270 = dma.done [#allocation5], 16
    $region49: #{tpu_custom_call.1} parent=1 // pred_fallthru
      _
    %271 = sfence
    %272 = vsyncpa [#allocation4], 1
    %273 = vsyncpa [#allocation7], 1
    %274 = vsyncpa [#allocation10], 1
    %275 = vsyncpa [#allocation5], 1

</llo_original>
